<compile_context>
chip_gen: v7x
topology: tpu7x:2x2x1
jax: 0.10.0
libtpu: 0.0.40
codegen_flags: <defaults>
</compile_context>

<pallas_src>
import functools

import jax
import jax.numpy as jnp
from jax import lax
from jax.experimental import pallas as pl
from jax.experimental.pallas import tpu as pltpu

EPS = 1e-10
LMB = 0.5
DELTA = 0.6
GAMMA = 0.5  # GAMMA == 0.5 -> pred ** GAMMA == sqrt(pred); (1 - GAMMA) power is also sqrt.

_SUB = 8                 # sublanes per f32 vreg
_LANE = 128              # lanes per vreg
_Q = _SUB * _LANE        # 1024 elements per (8, 128) superblock


def _cdiv(a, b):
    return -(-a // b)


def _default_n_cores():
    # v7x has 2 TensorCores per chip; v5e/v6e have 1.  Splitting the reduction
    # only helps on multi-TC chips, so default to 1 elsewhere.
    try:
        kind = jax.devices()[0].device_kind.lower()
    except Exception:
        return 1
    return 2 if ("v7" in kind or "tpu7" in kind) else 1


def _auf_partial_sums_kernel(pred_ref, gt_ref, mask_ref, out_ref, *,
                             hw, tile_super, chunk, n_steps, needs_mask):
    """Accumulate seven per-batch partial sums into a lane-resident accumulator.

    Block shapes:
      pred/gt/mask : (B, tile_super, 8, 128)  lane-dense f32 tiles
      out          : (7, B, 8, 128)           output-resident accumulator
                                              (one per leading 'core' index)
    """
    c = pl.program_id(0)
    i = pl.program_id(1)

    @pl.when(i == 0)
    def _init():
        out_ref[...] = jnp.zeros_like(out_ref)

    B = pred_ref.shape[0]
    n_chunks = tile_super // chunk
    # Global flat element offset of this grid block (unclamped: a fully
    # out-of-range trailing block masks itself out entirely).
    base = (c * n_steps + i) * (tile_super * _Q)

    def accumulate(masked):
        def chunk_body(k, carry):
            a_n, a_glp, a_plp, a_p, a_g, a_pg, a_npng = carry
            s = k * chunk
            if not isinstance(s, int):
                s = pl.multiple_of(s, chunk)
            pred = pred_ref[:, pl.ds(s, chunk), :, :]
            gt = gt_ref[:, pl.ds(s, chunk), :, :]
            m = mask_ref[:, pl.ds(s, chunk), :, :]
            p = jnp.clip(pred * m, EPS, 1.0 - EPS)
            g = jnp.clip(gt * m, EPS, 1.0 - EPS)
            if masked:
                # Exclude zero-pad tail / overrun garbage via the global flat
                # element index (never depends on the loaded values -> safe
                # even for unspecified out-of-bounds data).
                shape3 = (chunk, _SUB, _LANE)
                sb = lax.broadcasted_iota(jnp.int32, shape3, 0)
                row = lax.broadcasted_iota(jnp.int32, shape3, 1)
                lane = lax.broadcasted_iota(jnp.int32, shape3, 2)
                flat = base + (s + sb) * _Q + row * _LANE + lane
                valid = flat < hw                      # broadcasts over B
                m = jnp.where(valid, m, 0.0)
                g = jnp.where(valid, g, 0.0)
                p_sum = jnp.where(valid, p, 0.0)       # only used for sum(pred)
                p = jnp.where(valid, p, 1.0)           # log(1)=0, (1-p)=0, p*g=0
            else:
                p_sum = p
            logp = jnp.log(p)
            sqrtp = jnp.sqrt(p)                        # pred ** GAMMA, GAMMA == 0.5
            # Reduce only over the chunk axis (pure VPU adds, no cross-lane work).
            return (a_n + jnp.sum(m, axis=1),                          # sum(mask)
                    a_glp + jnp.sum(g * logp, axis=1),                 # sum(gt*log p)
                    a_plp + jnp.sum(sqrtp * logp, axis=1),             # sum(p^g*log p)
                    a_p + jnp.sum(p_sum, axis=1),                      # sum(p)
                    a_g + jnp.sum(g, axis=1),                          # sum(gt)
                    a_pg + jnp.sum(p * g, axis=1),                     # sum(p*gt)
                    a_npng + jnp.sum((1.0 - p) * (1.0 - g), axis=1))   # sum((1-p)(1-gt))

        zeros = jnp.zeros((B, _SUB, _LANE), jnp.float32)
        init = (zeros,) * 7
        if n_chunks == 1:
            acc = chunk_body(0, init)
        else:
            acc = lax.fori_loop(0, n_chunks, chunk_body, init, unroll=2)
        for idx in range(7):
            out_ref[idx] += acc[idx]

    if needs_mask:
        # Only the boundary (or fully out-of-range) block pays the masking work.
        is_boundary = base + tile_super * _Q > hw

        @pl.when(is_boundary)
        def _masked():
            accumulate(True)

        @pl.when(jnp.logical_not(is_boundary))
        def _clean():
            accumulate(False)
    else:
        accumulate(False)


def auf_loss(pred, gt, mask, *, target_block_bytes=4 << 20, n_cores=None):
    B, H, W = pred.shape
    HW = H * W
    if n_cores is None:
        n_cores = _default_n_cores()
    n_cores = max(1, int(n_cores))

    n_super = _cdiv(HW, _Q)          # (8,128) superblocks covering HW
    pad_elems = n_super * _Q - HW    # < 1024; nonzero only when HW % 1024 != 0

    # In-kernel chunk size (superblocks per fori_loop step): keep each full-chunk
    # temporary at ~8 vregs so the working set stays in registers.
    chunk = max(1, 8 // B)

    # Superblocks per grid block (~target_block_bytes per input per step).
    tile_super = max(chunk, target_block_bytes // (4 * B * _Q))
    tile_super = min(tile_super, n_super)
    if tile_super >= chunk:
        tile_super = (tile_super // chunk) * chunk
    else:
        chunk = tile_super

    tiles_total = _cdiv(n_super, tile_super)
    n_cores = min(n_cores, tiles_total)
    n_steps = _cdiv(tiles_total, n_cores)
    grid_blocks = n_cores * n_steps
    # Masking is needed whenever the grid coverage overruns HW (zero-pad tail
    # and/or non-dividing last block -> unspecified data in the overrun).
    needs_mask = grid_blocks * tile_super * _Q > HW

    def _prep(x):
        if x.dtype != jnp.float32:
            # TODO(synk): keep narrow gt/mask dtypes in HBM (packed views + own
            # BlockSpecs, cast in-kernel) instead of widening here.
            x = x.astype(jnp.float32)
        x = x.reshape(B, HW)
        if pad_elems:
            # TODO(synk): HW % 1024 != 0 still pays one padded HBM copy; fold the
            # <1024-element tail into the sums with a pure-JAX epilogue instead.
            x = jnp.pad(x, ((0, 0), (0, pad_elems)))
        return x.reshape(B, n_super, _SUB, _LANE)   # free reshape when no pad

    pred_r, gt_r, mask_r = _prep(pred), _prep(gt), _prep(mask)

    kernel = functools.partial(
        _auf_partial_sums_kernel,
        hw=HW, tile_super=tile_super, chunk=chunk, n_steps=n_steps,
        needs_mask=needs_mask,
    )

    last_block = tiles_total - 1

    def in_index(c, i):
        # Clamp so a trailing fully-out-of-range block (odd tiles_total split
        # across cores) re-reads the last real block; its contribution is zeroed
        # by the index-derived validity mask inside the kernel.
        return (0, jnp.minimum(c * n_steps + i, last_block), 0, 0)

    in_spec = pl.BlockSpec((B, tile_super, _SUB, _LANE), in_index)
    out_spec = pl.BlockSpec((None, 7, B, _SUB, _LANE), lambda c, i: (c, 0, 0, 0, 0))

    block_bytes = 4 * B * tile_super * _Q
    # 3 inputs x 2 pipeline buffers + headroom; v5e's 16 MiB default scoped VMEM
    # would otherwise reject 4 MiB blocks.  Capped well under v7x's 64 MiB.
    vmem_limit = min(48 << 20, max(32 << 20, 6 * block_bytes + (8 << 20)))

    partials = pl.pallas_call(
        kernel,
        out_shape=jax.ShapeDtypeStruct((n_cores, 7, B, _SUB, _LANE), jnp.float32),
        grid_spec=pltpu.PrefetchScalarGridSpec(
            num_scalar_prefetch=0,
            grid=(n_cores, n_steps),
            in_specs=[in_spec, in_spec, in_spec],
            out_specs=out_spec,
        ),
        compiler_params=pltpu.CompilerParams(
            # TODO(synk): on v7x confirm the leading axis actually shards across
            # both TensorCores; switch it to pltpu.CORE_PARALLEL if it does not.
            dimension_semantics=("parallel", "arbitrary"),
            vmem_limit_bytes=vmem_limit,
        ),
    )(pred_r, gt_r, mask_r)

    # ---- tiny epilogue (outside the kernel): combine cores + lanes, finish ----
    sums = jnp.sum(partials, axis=(0, 3, 4))     # (7, B)
    N = sums[0]
    s_gt_logp = sums[1]      # sum(gt * log(pred))
    s_pg_logp = sums[2]      # sum(pred**gamma * log(pred))
    s_p = sums[3]            # sum(pred)
    s_g = sums[4]            # sum(gt)
    s_pg = sums[5]           # sum(pred * gt)
    s_npng = sums[6]         # sum((1-pred)*(1-gt)), accumulated directly

    s_np_g = jnp.maximum(s_g - s_pg, 0.0)        # sum((1-pred) * gt)
    s_p_ng = jnp.maximum(s_p - s_pg, 0.0)        # sum(pred * (1-gt))

    maf = (-DELTA / N) * s_gt_logp - ((1.0 - DELTA) / N) * s_pg_logp
    mTI_neg = s_npng / (s_npng + DELTA * s_np_g + (1.0 - DELTA) * s_p_ng)
    mTI_pos = s_pg / (s_pg + DELTA * s_p_ng + (1.0 - DELTA) * s_np_g)
    maft = 1.0 - mTI_neg + jnp.sqrt(1.0 - mTI_pos)   # (1-mTI_pos)**(1-GAMMA), GAMMA=0.5
    return jnp.mean(LMB * maf + (1.0 - LMB) * maft)


def auf_loss_ref(pred, gt, mask):
    # pure-JAX reference of the PyTorch forward
    pred = jnp.clip(pred * mask, EPS, 1.0 - EPS)
    gt = jnp.clip(gt * mask, EPS, 1.0 - EPS)
    N = jnp.sum(mask, axis=(1, 2))
    maf = (-DELTA / N) * jnp.sum(gt * jnp.log(pred), axis=(1, 2)) - (
        (1.0 - DELTA) / N
    ) * jnp.sum((pred ** GAMMA) * jnp.log(pred), axis=(1, 2))
    mTI_neg = jnp.sum((1 - pred) * (1 - gt), axis=(1, 2)) / (
        jnp.sum((1 - pred) * (1 - gt), axis=(1, 2))
        + DELTA * jnp.sum((1 - pred) * gt, axis=(1, 2))
        + (1 - DELTA) * jnp.sum(pred * (1 - gt), axis=(1, 2))
    )
    mTI_pos = jnp.sum(pred * gt, axis=(1, 2)) / (
        jnp.sum(pred * gt, axis=(1, 2))
        + DELTA * jnp.sum(pred * (1 - gt), axis=(1, 2))
        + (1 - DELTA) * jnp.sum((1 - pred) * gt, axis=(1, 2))
    )
    maft = 1.0 - mTI_neg + (1.0 - mTI_pos) ** (1.0 - GAMMA)
    return jnp.mean(LMB * maf + (1.0 - LMB) * maft)


if __name__ == "__main__":
    key = jax.random.PRNGKey(0)
    jitted = jax.jit(auf_loss)
    # Covers: padded ragged shape (16x16), zero-copy exact shape (32x32),
    # and zero-copy with a non-dividing boundary block (64x96 -> 6 superblocks).
    for (B, H, W) in [(2, 16, 16), (2, 32, 32), (2, 64, 96)]:
        k1, k2, k3, key = jax.random.split(key, 4)
        pred = jax.nn.sigmoid(jax.random.normal(k1, (B, H, W), jnp.float32))
        gt = (jax.random.uniform(k2, (B, H, W)) > 0.5).astype(jnp.float32)
        mask = (jax.random.uniform(k3, (B, H, W)) > 0.2).astype(jnp.float32)

        loss = jitted(pred, gt, mask)
        jax.block_until_ready(loss)

        ref = auf_loss_ref(pred, gt, mask)
        assert jnp.allclose(loss, ref, rtol=1e-4, atol=1e-5), (B, H, W, loss, ref)

    print("KERNEL_OK")
</pallas_src>

<mosaic_0001>
module attributes {stable_mosaic.version = 11 : i64} {
  func.func @_auf_partial_sums_kernel(%arg0: i32, %arg1: i32, %arg2: memref<2x1x8x128xf32, #tpu.memory_space<vmem>>, %arg3: memref<2x1x8x128xf32, #tpu.memory_space<vmem>>, %arg4: memref<2x1x8x128xf32, #tpu.memory_space<vmem>>, %arg5: memref<1x7x2x8x128xf32, #tpu.memory_space<vmem>>) attributes {dimension_semantics = [#tpu.dimension_semantics<parallel>, #tpu.dimension_semantics<arbitrary>], iteration_bounds = array<i64: 1, 1>, scalar_prefetch = 0 : i64, scratch_operands = 0 : i64, tpu.core_type = #tpu.core_type<tc>, window_params = [{transform_indices = @transform_0, window_bounds = array<i64: 2, 1, 8, 128>}, {transform_indices = @transform_1, window_bounds = array<i64: 2, 1, 8, 128>}, {transform_indices = @transform_2, window_bounds = array<i64: 2, 1, 8, 128>}, {transform_indices = @transform_3, window_bounds = array<i64: 1, 7, 2, 8, 128>}]} {
    %c0_i32 = arith.constant 0 : i32
    %0 = arith.cmpi eq, %arg1, %c0_i32 : i32
    %1 = arith.extui %0 : i1 to i32
    %c0_i32_0 = arith.constant 0 : i32
    %2 = arith.cmpi ne, %1, %c0_i32_0 : i32
    scf.if %2 {
      %cst = arith.constant 0.000000e+00 : f32
      %13 = vector.broadcast %cst : f32 to vector<7x2x8x128xf32>
      %c0 = arith.constant 0 : index
      %c0_4 = arith.constant 0 : index
      %c0_5 = arith.constant 0 : index
      %c0_6 = arith.constant 0 : index
      %c0_7 = arith.constant 0 : index
      %14 = vector.load %arg5[%c0, %c0_4, %c0_5, %c0_6, %c0_7] : memref<1x7x2x8x128xf32, #tpu.memory_space<vmem>>, vector<1x7x2x8x128xf32>
      %15 = vector.shape_cast %14 : vector<1x7x2x8x128xf32> to vector<7x2x8x128xf32>
      %16 = vector.shape_cast %13 : vector<7x2x8x128xf32> to vector<1x7x2x8x128xf32>
      tpu.vector_store %arg5[%c0, %c0_4, %c0_5, %c0_6, %c0_7], %16 {strides = array<i32>} : memref<1x7x2x8x128xf32, #tpu.memory_space<vmem>>, vector<1x7x2x8x128xf32>,
    } else {
    }
    %c1_i32 = arith.constant 1 : i32
    %3 = arith.muli %arg0, %c1_i32 : i32
    %4 = arith.addi %3, %arg1 : i32
    %c1024_i32 = arith.constant 1024 : i32
    %5 = arith.muli %4, %c1024_i32 : i32
    %c1024_i32_1 = arith.constant 1024 : i32
    %6 = arith.addi %5, %c1024_i32_1 : i32
    %c256_i32 = arith.constant 256 : i32
    %7 = arith.cmpi sgt, %6, %c256_i32 : i32
    %8 = arith.extui %7 : i1 to i32
    %c0_i32_2 = arith.constant 0 : i32
    %9 = arith.cmpi ne, %8, %c0_i32_2 : i32
    scf.if %9 {
      %cst = arith.constant 0.000000e+00 : f32
      %13 = vector.broadcast %cst : f32 to vector<2x8x128xf32>
      %c0 = arith.constant 0 : index
      %c0_4 = arith.constant 0 : index
      %c0_5 = arith.constant 0 : index
      %c0_6 = arith.constant 0 : index
      %14 = vector.load %arg2[%c0, %c0_4, %c0_5, %c0_6] : memref<2x1x8x128xf32, #tpu.memory_space<vmem>>, vector<2x1x8x128xf32>
      %c0_7 = arith.constant 0 : index
      %c0_8 = arith.constant 0 : index
      %c0_9 = arith.constant 0 : index
      %c0_10 = arith.constant 0 : index
      %15 = vector.load %arg3[%c0_7, %c0_8, %c0_9, %c0_10] : memref<2x1x8x128xf32, #tpu.memory_space<vmem>>, vector<2x1x8x128xf32>
      %c0_11 = arith.constant 0 : index
      %c0_12 = arith.constant 0 : index
      %c0_13 = arith.constant 0 : index
      %c0_14 = arith.constant 0 : index
      %16 = vector.load %arg4[%c0_11, %c0_12, %c0_13, %c0_14] : memref<2x1x8x128xf32, #tpu.memory_space<vmem>>, vector<2x1x8x128xf32>
      %17 = arith.mulf %14, %16 : vector<2x1x8x128xf32>
      %cst_15 = arith.constant 1.000000e-10 : f32
      %cst_16 = arith.constant 1.000000e+00 : f32
      %18 = vector.broadcast %cst_15 : f32 to vector<2x1x8x128xf32>
      %19 = arith.maximumf %18, %17 : vector<2x1x8x128xf32>
      %20 = vector.broadcast %cst_16 : f32 to vector<2x1x8x128xf32>
      %21 = arith.minimumf %20, %19 : vector<2x1x8x128xf32>
      %22 = arith.mulf %15, %16 : vector<2x1x8x128xf32>
      %cst_17 = arith.constant 1.000000e-10 : f32
      %cst_18 = arith.constant 1.000000e+00 : f32
      %23 = vector.broadcast %cst_17 : f32 to vector<2x1x8x128xf32>
      %24 = arith.maximumf %23, %22 : vector<2x1x8x128xf32>
      %25 = vector.broadcast %cst_18 : f32 to vector<2x1x8x128xf32>
      %26 = arith.minimumf %25, %24 : vector<2x1x8x128xf32>
      %27 = tpu.iota {dimensions = array<i32: 0>} : vector<1x8x128xi32>
      %28 = tpu.iota {dimensions = array<i32: 1>} : vector<1x8x128xi32>
      %29 = tpu.iota {dimensions = array<i32: 2>} : vector<1x8x128xi32>
      %c0_i32_19 = arith.constant 0 : i32
      %30 = vector.broadcast %c0_i32_19 : i32 to vector<1x8x128xi32>
      %31 = arith.addi %30, %27 : vector<1x8x128xi32>
      %c1024_i32_20 = arith.constant 1024 : i32
      %32 = vector.broadcast %c1024_i32_20 : i32 to vector<1x8x128xi32>
      %33 = arith.muli %31, %32 : vector<1x8x128xi32>
      %34 = vector.broadcast %5 : i32 to vector<1x8x128xi32>
      %35 = arith.addi %34, %33 : vector<1x8x128xi32>
      %c128_i32 = arith.constant 128 : i32
      %36 = vector.broadcast %c128_i32 : i32 to vector<1x8x128xi32>
      %37 = arith.muli %28, %36 : vector<1x8x128xi32>
      %38 = arith.addi %35, %37 : vector<1x8x128xi32>
      %39 = arith.addi %38, %29 : vector<1x8x128xi32>
      %c256_i32_21 = arith.constant 256 : i32
      %40 = vector.broadcast %c256_i32_21 : i32 to vector<1x8x128xi32>
      %41 = arith.cmpi slt, %39, %40 : vector<1x8x128xi32>
      %cst_22 = arith.constant 0.000000e+00 : f32
      %42 = vector.shape_cast %41 : vector<1x8x128xi1> to vector<1x1x8x128xi1>
      %43 = vector.broadcast %42 : vector<1x1x8x128xi1> to vector<2x1x8x128xi1>
      %44 = vector.broadcast %cst_22 : f32 to vector<2x1x8x128xf32>
      %45 = arith.select %43, %16, %44 : vector<2x1x8x128xi1>, vector<2x1x8x128xf32>
      %cst_23 = arith.constant 0.000000e+00 : f32
      %46 = vector.shape_cast %41 : vector<1x8x128xi1> to vector<1x1x8x128xi1>
      %47 = vector.broadcast %46 : vector<1x1x8x128xi1> to vector<2x1x8x128xi1>
      %48 = vector.broadcast %cst_23 : f32 to vector<2x1x8x128xf32>
      %49 = arith.select %47, %26, %48 : vector<2x1x8x128xi1>, vector<2x1x8x128xf32>
      %cst_24 = arith.constant 0.000000e+00 : f32
      %50 = vector.shape_cast %41 : vector<1x8x128xi1> to vector<1x1x8x128xi1>
      %51 = vector.broadcast %50 : vector<1x1x8x128xi1> to vector<2x1x8x128xi1>
      %52 = vector.broadcast %cst_24 : f32 to vector<2x1x8x128xf32>
      %53 = arith.select %51, %21, %52 : vector<2x1x8x128xi1>, vector<2x1x8x128xf32>
      %cst_25 = arith.constant 1.000000e+00 : f32
      %54 = vector.shape_cast %41 : vector<1x8x128xi1> to vector<1x1x8x128xi1>
      %55 = vector.broadcast %54 : vector<1x1x8x128xi1> to vector<2x1x8x128xi1>
      %56 = vector.broadcast %cst_25 : f32 to vector<2x1x8x128xf32>
      %57 = arith.select %55, %21, %56 : vector<2x1x8x128xi1>, vector<2x1x8x128xf32>
      %58 = math.log %57 : vector<2x1x8x128xf32>
      %59 = math.sqrt %57 : vector<2x1x8x128xf32>
      %cst_26 = arith.constant dense<0.000000e+00> : vector<2x8x128xf32>
      %60 = vector.multi_reduction <add>, %45, %cst_26 [1] : vector<2x1x8x128xf32> to vector<2x8x128xf32>
      %61 = arith.addf %13, %60 : vector<2x8x128xf32>
      %62 = arith.mulf %49, %58 : vector<2x1x8x128xf32>
      %cst_27 = arith.constant dense<0.000000e+00> : vector<2x8x128xf32>
      %63 = vector.multi_reduction <add>, %62, %cst_27 [1] : vector<2x1x8x128xf32> to vector<2x8x128xf32>
      %64 = arith.addf %13, %63 : vector<2x8x128xf32>
      %65 = arith.mulf %59, %58 : vector<2x1x8x128xf32>
      %cst_28 = arith.constant dense<0.000000e+00> : vector<2x8x128xf32>
      %66 = vector.multi_reduction <add>, %65, %cst_28 [1] : vector<2x1x8x128xf32> to vector<2x8x128xf32>
      %67 = arith.addf %13, %66 : vector<2x8x128xf32>
      %cst_29 = arith.constant dense<0.000000e+00> : vector<2x8x128xf32>
      %68 = vector.multi_reduction <add>, %53, %cst_29 [1] : vector<2x1x8x128xf32> to vector<2x8x128xf32>
      %69 = arith.addf %13, %68 : vector<2x8x128xf32>
      %cst_30 = arith.constant dense<0.000000e+00> : vector<2x8x128xf32>
      %70 = vector.multi_reduction <add>, %49, %cst_30 [1] : vector<2x1x8x128xf32> to vector<2x8x128xf32>
      %71 = arith.addf %13, %70 : vector<2x8x128xf32>
      %72 = arith.mulf %57, %49 : vector<2x1x8x128xf32>
      %cst_31 = arith.constant dense<0.000000e+00> : vector<2x8x128xf32>
      %73 = vector.multi_reduction <add>, %72, %cst_31 [1] : vector<2x1x8x128xf32> to vector<2x8x128xf32>
      %74 = arith.addf %13, %73 : vector<2x8x128xf32>
      %cst_32 = arith.constant 1.000000e+00 : f32
      %75 = vector.broadcast %cst_32 : f32 to vector<2x1x8x128xf32>
      %76 = arith.subf %75, %57 : vector<2x1x8x128xf32>
      %cst_33 = arith.constant 1.000000e+00 : f32
      %77 = vector.broadcast %cst_33 : f32 to vector<2x1x8x128xf32>
      %78 = arith.subf %77, %49 : vector<2x1x8x128xf32>
      %79 = arith.mulf %76, %78 : vector<2x1x8x128xf32>
      %cst_34 = arith.constant dense<0.000000e+00> : vector<2x8x128xf32>
      %80 = vector.multi_reduction <add>, %79, %cst_34 [1] : vector<2x1x8x128xf32> to vector<2x8x128xf32>
      %81 = arith.addf %13, %80 : vector<2x8x128xf32>
      %c0_35 = arith.constant 0 : index
      %c0_36 = arith.constant 0 : index
      %c0_37 = arith.constant 0 : index
      %c0_38 = arith.constant 0 : index
      %c0_39 = arith.constant 0 : index
      %82 = vector.load %arg5[%c0_35, %c0_36, %c0_37, %c0_38, %c0_39] : memref<1x7x2x8x128xf32, #tpu.memory_space<vmem>>, vector<1x1x2x8x128xf32>
      %83 = vector.shape_cast %82 : vector<1x1x2x8x128xf32> to vector<2x8x128xf32>
      %84 = arith.addf %83, %61 : vector<2x8x128xf32>
      %c0_40 = arith.constant 0 : index
      %c0_41 = arith.constant 0 : index
      %c0_42 = arith.constant 0 : index
      %c0_43 = arith.constant 0 : index
      %c0_44 = arith.constant 0 : index
      %85 = vector.load %arg5[%c0_40, %c0_41, %c0_42, %c0_43, %c0_44] : memref<1x7x2x8x128xf32, #tpu.memory_space<vmem>>, vector<1x1x2x8x128xf32>
      %86 = vector.shape_cast %85 : vector<1x1x2x8x128xf32> to vector<2x8x128xf32>
      %87 = vector.shape_cast %84 : vector<2x8x128xf32> to vector<1x1x2x8x128xf32>
      tpu.vector_store %arg5[%c0_40, %c0_41, %c0_42, %c0_43, %c0_44], %87 {strides = array<i32>} : memref<1x7x2x8x128xf32, #tpu.memory_space<vmem>>, vector<1x1x2x8x128xf32>,
      %c0_45 = arith.constant 0 : index
      %c1 = arith.constant 1 : index
      %c0_46 = arith.constant 0 : index
      %c0_47 = arith.constant 0 : index
      %c0_48 = arith.constant 0 : index
      %88 = vector.load %arg5[%c0_45, %c1, %c0_46, %c0_47, %c0_48] : memref<1x7x2x8x128xf32, #tpu.memory_space<vmem>>, vector<1x1x2x8x128xf32>
      %89 = vector.shape_cast %88 : vector<1x1x2x8x128xf32> to vector<2x8x128xf32>
      %90 = arith.addf %89, %64 : vector<2x8x128xf32>
      %c0_49 = arith.constant 0 : index
      %c1_50 = arith.constant 1 : index
      %c0_51 = arith.constant 0 : index
      %c0_52 = arith.constant 0 : index
      %c0_53 = arith.constant 0 : index
      %91 = vector.load %arg5[%c0_49, %c1_50, %c0_51, %c0_52, %c0_53] : memref<1x7x2x8x128xf32, #tpu.memory_space<vmem>>, vector<1x1x2x8x128xf32>
      %92 = vector.shape_cast %91 : vector<1x1x2x8x128xf32> to vector<2x8x128xf32>
      %93 = vector.shape_cast %90 : vector<2x8x128xf32> to vector<1x1x2x8x128xf32>
      tpu.vector_store %arg5[%c0_49, %c1_50, %c0_51, %c0_52, %c0_53], %93 {strides = array<i32>} : memref<1x7x2x8x128xf32, #tpu.memory_space<vmem>>, vector<1x1x2x8x128xf32>,
      %c0_54 = arith.constant 0 : index
      %c2 = arith.constant 2 : index
      %c0_55 = arith.constant 0 : index
      %c0_56 = arith.constant 0 : index
      %c0_57 = arith.constant 0 : index
      %94 = vector.load %arg5[%c0_54, %c2, %c0_55, %c0_56, %c0_57] : memref<1x7x2x8x128xf32, #tpu.memory_space<vmem>>, vector<1x1x2x8x128xf32>
      %95 = vector.shape_cast %94 : vector<1x1x2x8x128xf32> to vector<2x8x128xf32>
      %96 = arith.addf %95, %67 : vector<2x8x128xf32>
      %c0_58 = arith.constant 0 : index
      %c2_59 = arith.constant 2 : index
      %c0_60 = arith.constant 0 : index
      %c0_61 = arith.constant 0 : index
      %c0_62 = arith.constant 0 : index
      %97 = vector.load %arg5[%c0_58, %c2_59, %c0_60, %c0_61, %c0_62] : memref<1x7x2x8x128xf32, #tpu.memory_space<vmem>>, vector<1x1x2x8x128xf32>
      %98 = vector.shape_cast %97 : vector<1x1x2x8x128xf32> to vector<2x8x128xf32>
      %99 = vector.shape_cast %96 : vector<2x8x128xf32> to vector<1x1x2x8x128xf32>
      tpu.vector_store %arg5[%c0_58, %c2_59, %c0_60, %c0_61, %c0_62], %99 {strides = array<i32>} : memref<1x7x2x8x128xf32, #tpu.memory_space<vmem>>, vector<1x1x2x8x128xf32>,
      %c0_63 = arith.constant 0 : index
      %c3 = arith.constant 3 : index
      %c0_64 = arith.constant 0 : index
      %c0_65 = arith.constant 0 : index
      %c0_66 = arith.constant 0 : index
      %100 = vector.load %arg5[%c0_63, %c3, %c0_64, %c0_65, %c0_66] : memref<1x7x2x8x128xf32, #tpu.memory_space<vmem>>, vector<1x1x2x8x128xf32>
      %101 = vector.shape_cast %100 : vector<1x1x2x8x128xf32> to vector<2x8x128xf32>
      %102 = arith.addf %101, %69 : vector<2x8x128xf32>
      %c0_67 = arith.constant 0 : index
      %c3_68 = arith.constant 3 : index
      %c0_69 = arith.constant 0 : index
      %c0_70 = arith.constant 0 : index
      %c0_71 = arith.constant 0 : index
      %103 = vector.load %arg5[%c0_67, %c3_68, %c0_69, %c0_70, %c0_71] : memref<1x7x2x8x128xf32, #tpu.memory_space<vmem>>, vector<1x1x2x8x128xf32>
      %104 = vector.shape_cast %103 : vector<1x1x2x8x128xf32> to vector<2x8x128xf32>
      %105 = vector.shape_cast %102 : vector<2x8x128xf32> to vector<1x1x2x8x128xf32>
      tpu.vector_store %arg5[%c0_67, %c3_68, %c0_69, %c0_70, %c0_71], %105 {strides = array<i32>} : memref<1x7x2x8x128xf32, #tpu.memory_space<vmem>>, vector<1x1x2x8x128xf32>,
      %c0_72 = arith.constant 0 : index
      %c4 = arith.constant 4 : index
      %c0_73 = arith.constant 0 : index
      %c0_74 = arith.constant 0 : index
      %c0_75 = arith.constant 0 : index
      %106 = vector.load %arg5[%c0_72, %c4, %c0_73, %c0_74, %c0_75] : memref<1x7x2x8x128xf32, #tpu.memory_space<vmem>>, vector<1x1x2x8x128xf32>
      %107 = vector.shape_cast %106 : vector<1x1x2x8x128xf32> to vector<2x8x128xf32>
      %108 = arith.addf %107, %71 : vector<2x8x128xf32>
      %c0_76 = arith.constant 0 : index
      %c4_77 = arith.constant 4 : index
      %c0_78 = arith.constant 0 : index
      %c0_79 = arith.constant 0 : index
      %c0_80 = arith.constant 0 : index
      %109 = vector.load %arg5[%c0_76, %c4_77, %c0_78, %c0_79, %c0_80] : memref<1x7x2x8x128xf32, #tpu.memory_space<vmem>>, vector<1x1x2x8x128xf32>
      %110 = vector.shape_cast %109 : vector<1x1x2x8x128xf32> to vector<2x8x128xf32>
      %111 = vector.shape_cast %108 : vector<2x8x128xf32> to vector<1x1x2x8x128xf32>
      tpu.vector_store %arg5[%c0_76, %c4_77, %c0_78, %c0_79, %c0_80], %111 {strides = array<i32>} : memref<1x7x2x8x128xf32, #tpu.memory_space<vmem>>, vector<1x1x2x8x128xf32>,
      %c0_81 = arith.constant 0 : index
      %c5 = arith.constant 5 : index
      %c0_82 = arith.constant 0 : index
      %c0_83 = arith.constant 0 : index
      %c0_84 = arith.constant 0 : index
      %112 = vector.load %arg5[%c0_81, %c5, %c0_82, %c0_83, %c0_84] : memref<1x7x2x8x128xf32, #tpu.memory_space<vmem>>, vector<1x1x2x8x128xf32>
      %113 = vector.shape_cast %112 : vector<1x1x2x8x128xf32> to vector<2x8x128xf32>
      %114 = arith.addf %113, %74 : vector<2x8x128xf32>
      %c0_85 = arith.constant 0 : index
      %c5_86 = arith.constant 5 : index
      %c0_87 = arith.constant 0 : index
      %c0_88 = arith.constant 0 : index
      %c0_89 = arith.constant 0 : index
      %115 = vector.load %arg5[%c0_85, %c5_86, %c0_87, %c0_88, %c0_89] : memref<1x7x2x8x128xf32, #tpu.memory_space<vmem>>, vector<1x1x2x8x128xf32>
      %116 = vector.shape_cast %115 : vector<1x1x2x8x128xf32> to vector<2x8x128xf32>
      %117 = vector.shape_cast %114 : vector<2x8x128xf32> to vector<1x1x2x8x128xf32>
      tpu.vector_store %arg5[%c0_85, %c5_86, %c0_87, %c0_88, %c0_89], %117 {strides = array<i32>} : memref<1x7x2x8x128xf32, #tpu.memory_space<vmem>>, vector<1x1x2x8x128xf32>,
      %c0_90 = arith.constant 0 : index
      %c6 = arith.constant 6 : index
      %c0_91 = arith.constant 0 : index
      %c0_92 = arith.constant 0 : index
      %c0_93 = arith.constant 0 : index
      %118 = vector.load %arg5[%c0_90, %c6, %c0_91, %c0_92, %c0_93] : memref<1x7x2x8x128xf32, #tpu.memory_space<vmem>>, vector<1x1x2x8x128xf32>
      %119 = vector.shape_cast %118 : vector<1x1x2x8x128xf32> to vector<2x8x128xf32>
      %120 = arith.addf %119, %81 : vector<2x8x128xf32>
      %c0_94 = arith.constant 0 : index
      %c6_95 = arith.constant 6 : index
      %c0_96 = arith.constant 0 : index
      %c0_97 = arith.constant 0 : index
      %c0_98 = arith.constant 0 : index
      %121 = vector.load %arg5[%c0_94, %c6_95, %c0_96, %c0_97, %c0_98] : memref<1x7x2x8x128xf32, #tpu.memory_space<vmem>>, vector<1x1x2x8x128xf32>
      %122 = vector.shape_cast %121 : vector<1x1x2x8x128xf32> to vector<2x8x128xf32>
      %123 = vector.shape_cast %120 : vector<2x8x128xf32> to vector<1x1x2x8x128xf32>
      tpu.vector_store %arg5[%c0_94, %c6_95, %c0_96, %c0_97, %c0_98], %123 {strides = array<i32>} : memref<1x7x2x8x128xf32, #tpu.memory_space<vmem>>, vector<1x1x2x8x128xf32>,
    } else {
    }
    %true = arith.constant true
    %10 = arith.xori %7, %true : i1
    %11 = arith.extui %10 : i1 to i32
    %c0_i32_3 = arith.constant 0 : i32
    %12 = arith.cmpi ne, %11, %c0_i32_3 : i32
    scf.if %12 {
      %cst = arith.constant 0.000000e+00 : f32
      %13 = vector.broadcast %cst : f32 to vector<2x8x128xf32>
      %c0 = arith.constant 0 : index
      %c0_4 = arith.constant 0 : index
      %c0_5 = arith.constant 0 : index
      %c0_6 = arith.constant 0 : index
      %14 = vector.load %arg2[%c0, %c0_4, %c0_5, %c0_6] : memref<2x1x8x128xf32, #tpu.memory_space<vmem>>, vector<2x1x8x128xf32>
      %c0_7 = arith.constant 0 : index
      %c0_8 = arith.constant 0 : index
      %c0_9 = arith.constant 0 : index
      %c0_10 = arith.constant 0 : index
      %15 = vector.load %arg3[%c0_7, %c0_8, %c0_9, %c0_10] : memref<2x1x8x128xf32, #tpu.memory_space<vmem>>, vector<2x1x8x128xf32>
      %c0_11 = arith.constant 0 : index
      %c0_12 = arith.constant 0 : index
      %c0_13 = arith.constant 0 : index
      %c0_14 = arith.constant 0 : index
      %16 = vector.load %arg4[%c0_11, %c0_12, %c0_13, %c0_14] : memref<2x1x8x128xf32, #tpu.memory_space<vmem>>, vector<2x1x8x128xf32>
      %17 = arith.mulf %14, %16 : vector<2x1x8x128xf32>
      %cst_15 = arith.constant 1.000000e-10 : f32
      %cst_16 = arith.constant 1.000000e+00 : f32
      %18 = vector.broadcast %cst_15 : f32 to vector<2x1x8x128xf32>
      %19 = arith.maximumf %18, %17 : vector<2x1x8x128xf32>
      %20 = vector.broadcast %cst_16 : f32 to vector<2x1x8x128xf32>
      %21 = arith.minimumf %20, %19 : vector<2x1x8x128xf32>
      %22 = arith.mulf %15, %16 : vector<2x1x8x128xf32>
      %cst_17 = arith.constant 1.000000e-10 : f32
      %cst_18 = arith.constant 1.000000e+00 : f32
      %23 = vector.broadcast %cst_17 : f32 to vector<2x1x8x128xf32>
      %24 = arith.maximumf %23, %22 : vector<2x1x8x128xf32>
      %25 = vector.broadcast %cst_18 : f32 to vector<2x1x8x128xf32>
      %26 = arith.minimumf %25, %24 : vector<2x1x8x128xf32>
      %27 = math.log %21 : vector<2x1x8x128xf32>
      %28 = math.sqrt %21 : vector<2x1x8x128xf32>
      %cst_19 = arith.constant dense<0.000000e+00> : vector<2x8x128xf32>
      %29 = vector.multi_reduction <add>, %16, %cst_19 [1] : vector<2x1x8x128xf32> to vector<2x8x128xf32>
      %30 = arith.addf %13, %29 : vector<2x8x128xf32>
      %31 = arith.mulf %26, %27 : vector<2x1x8x128xf32>
      %cst_20 = arith.constant dense<0.000000e+00> : vector<2x8x128xf32>
      %32 = vector.multi_reduction <add>, %31, %cst_20 [1] : vector<2x1x8x128xf32> to vector<2x8x128xf32>
      %33 = arith.addf %13, %32 : vector<2x8x128xf32>
      %34 = arith.mulf %28, %27 : vector<2x1x8x128xf32>
      %cst_21 = arith.constant dense<0.000000e+00> : vector<2x8x128xf32>
      %35 = vector.multi_reduction <add>, %34, %cst_21 [1] : vector<2x1x8x128xf32> to vector<2x8x128xf32>
      %36 = arith.addf %13, %35 : vector<2x8x128xf32>
      %cst_22 = arith.constant dense<0.000000e+00> : vector<2x8x128xf32>
      %37 = vector.multi_reduction <add>, %21, %cst_22 [1] : vector<2x1x8x128xf32> to vector<2x8x128xf32>
      %38 = arith.addf %13, %37 : vector<2x8x128xf32>
      %cst_23 = arith.constant dense<0.000000e+00> : vector<2x8x128xf32>
      %39 = vector.multi_reduction <add>, %26, %cst_23 [1] : vector<2x1x8x128xf32> to vector<2x8x128xf32>
      %40 = arith.addf %13, %39 : vector<2x8x128xf32>
      %41 = arith.mulf %21, %26 : vector<2x1x8x128xf32>
      %cst_24 = arith.constant dense<0.000000e+00> : vector<2x8x128xf32>
      %42 = vector.multi_reduction <add>, %41, %cst_24 [1] : vector<2x1x8x128xf32> to vector<2x8x128xf32>
      %43 = arith.addf %13, %42 : vector<2x8x128xf32>
      %cst_25 = arith.constant 1.000000e+00 : f32
      %44 = vector.broadcast %cst_25 : f32 to vector<2x1x8x128xf32>
      %45 = arith.subf %44, %21 : vector<2x1x8x128xf32>
      %cst_26 = arith.constant 1.000000e+00 : f32
      %46 = vector.broadcast %cst_26 : f32 to vector<2x1x8x128xf32>
      %47 = arith.subf %46, %26 : vector<2x1x8x128xf32>
      %48 = arith.mulf %45, %47 : vector<2x1x8x128xf32>
      %cst_27 = arith.constant dense<0.000000e+00> : vector<2x8x128xf32>
      %49 = vector.multi_reduction <add>, %48, %cst_27 [1] : vector<2x1x8x128xf32> to vector<2x8x128xf32>
      %50 = arith.addf %13, %49 : vector<2x8x128xf32>
      %c0_28 = arith.constant 0 : index
      %c0_29 = arith.constant 0 : index
      %c0_30 = arith.constant 0 : index
      %c0_31 = arith.constant 0 : index
      %c0_32 = arith.constant 0 : index
      %51 = vector.load %arg5[%c0_28, %c0_29, %c0_30, %c0_31, %c0_32] : memref<1x7x2x8x128xf32, #tpu.memory_space<vmem>>, vector<1x1x2x8x128xf32>
      %52 = vector.shape_cast %51 : vector<1x1x2x8x128xf32> to vector<2x8x128xf32>
      %53 = arith.addf %52, %30 : vector<2x8x128xf32>
      %c0_33 = arith.constant 0 : index
      %c0_34 = arith.constant 0 : index
      %c0_35 = arith.constant 0 : index
      %c0_36 = arith.constant 0 : index
      %c0_37 = arith.constant 0 : index
      %54 = vector.load %arg5[%c0_33, %c0_34, %c0_35, %c0_36, %c0_37] : memref<1x7x2x8x128xf32, #tpu.memory_space<vmem>>, vector<1x1x2x8x128xf32>
      %55 = vector.shape_cast %54 : vector<1x1x2x8x128xf32> to vector<2x8x128xf32>
      %56 = vector.shape_cast %53 : vector<2x8x128xf32> to vector<1x1x2x8x128xf32>
      tpu.vector_store %arg5[%c0_33, %c0_34, %c0_35, %c0_36, %c0_37], %56 {strides = array<i32>} : memref<1x7x2x8x128xf32, #tpu.memory_space<vmem>>, vector<1x1x2x8x128xf32>,
      %c0_38 = arith.constant 0 : index
      %c1 = arith.constant 1 : index
      %c0_39 = arith.constant 0 : index
      %c0_40 = arith.constant 0 : index
      %c0_41 = arith.constant 0 : index
      %57 = vector.load %arg5[%c0_38, %c1, %c0_39, %c0_40, %c0_41] : memref<1x7x2x8x128xf32, #tpu.memory_space<vmem>>, vector<1x1x2x8x128xf32>
      %58 = vector.shape_cast %57 : vector<1x1x2x8x128xf32> to vector<2x8x128xf32>
      %59 = arith.addf %58, %33 : vector<2x8x128xf32>
      %c0_42 = arith.constant 0 : index
      %c1_43 = arith.constant 1 : index
      %c0_44 = arith.constant 0 : index
      %c0_45 = arith.constant 0 : index
      %c0_46 = arith.constant 0 : index
      %60 = vector.load %arg5[%c0_42, %c1_43, %c0_44, %c0_45, %c0_46] : memref<1x7x2x8x128xf32, #tpu.memory_space<vmem>>, vector<1x1x2x8x128xf32>
      %61 = vector.shape_cast %60 : vector<1x1x2x8x128xf32> to vector<2x8x128xf32>
      %62 = vector.shape_cast %59 : vector<2x8x128xf32> to vector<1x1x2x8x128xf32>
      tpu.vector_store %arg5[%c0_42, %c1_43, %c0_44, %c0_45, %c0_46], %62 {strides = array<i32>} : memref<1x7x2x8x128xf32, #tpu.memory_space<vmem>>, vector<1x1x2x8x128xf32>,
      %c0_47 = arith.constant 0 : index
      %c2 = arith.constant 2 : index
      %c0_48 = arith.constant 0 : index
      %c0_49 = arith.constant 0 : index
      %c0_50 = arith.constant 0 : index
      %63 = vector.load %arg5[%c0_47, %c2, %c0_48, %c0_49, %c0_50] : memref<1x7x2x8x128xf32, #tpu.memory_space<vmem>>, vector<1x1x2x8x128xf32>
      %64 = vector.shape_cast %63 : vector<1x1x2x8x128xf32> to vector<2x8x128xf32>
      %65 = arith.addf %64, %36 : vector<2x8x128xf32>
      %c0_51 = arith.constant 0 : index
      %c2_52 = arith.constant 2 : index
      %c0_53 = arith.constant 0 : index
      %c0_54 = arith.constant 0 : index
      %c0_55 = arith.constant 0 : index
      %66 = vector.load %arg5[%c0_51, %c2_52, %c0_53, %c0_54, %c0_55] : memref<1x7x2x8x128xf32, #tpu.memory_space<vmem>>, vector<1x1x2x8x128xf32>
      %67 = vector.shape_cast %66 : vector<1x1x2x8x128xf32> to vector<2x8x128xf32>
      %68 = vector.shape_cast %65 : vector<2x8x128xf32> to vector<1x1x2x8x128xf32>
      tpu.vector_store %arg5[%c0_51, %c2_52, %c0_53, %c0_54, %c0_55], %68 {strides = array<i32>} : memref<1x7x2x8x128xf32, #tpu.memory_space<vmem>>, vector<1x1x2x8x128xf32>,
      %c0_56 = arith.constant 0 : index
      %c3 = arith.constant 3 : index
      %c0_57 = arith.constant 0 : index
      %c0_58 = arith.constant 0 : index
      %c0_59 = arith.constant 0 : index
      %69 = vector.load %arg5[%c0_56, %c3, %c0_57, %c0_58, %c0_59] : memref<1x7x2x8x128xf32, #tpu.memory_space<vmem>>, vector<1x1x2x8x128xf32>
      %70 = vector.shape_cast %69 : vector<1x1x2x8x128xf32> to vector<2x8x128xf32>
      %71 = arith.addf %70, %38 : vector<2x8x128xf32>
      %c0_60 = arith.constant 0 : index
      %c3_61 = arith.constant 3 : index
      %c0_62 = arith.constant 0 : index
      %c0_63 = arith.constant 0 : index
      %c0_64 = arith.constant 0 : index
      %72 = vector.load %arg5[%c0_60, %c3_61, %c0_62, %c0_63, %c0_64] : memref<1x7x2x8x128xf32, #tpu.memory_space<vmem>>, vector<1x1x2x8x128xf32>
      %73 = vector.shape_cast %72 : vector<1x1x2x8x128xf32> to vector<2x8x128xf32>
      %74 = vector.shape_cast %71 : vector<2x8x128xf32> to vector<1x1x2x8x128xf32>
      tpu.vector_store %arg5[%c0_60, %c3_61, %c0_62, %c0_63, %c0_64], %74 {strides = array<i32>} : memref<1x7x2x8x128xf32, #tpu.memory_space<vmem>>, vector<1x1x2x8x128xf32>,
      %c0_65 = arith.constant 0 : index
      %c4 = arith.constant 4 : index
      %c0_66 = arith.constant 0 : index
      %c0_67 = arith.constant 0 : index
      %c0_68 = arith.constant 0 : index
      %75 = vector.load %arg5[%c0_65, %c4, %c0_66, %c0_67, %c0_68] : memref<1x7x2x8x128xf32, #tpu.memory_space<vmem>>, vector<1x1x2x8x128xf32>
      %76 = vector.shape_cast %75 : vector<1x1x2x8x128xf32> to vector<2x8x128xf32>
      %77 = arith.addf %76, %40 : vector<2x8x128xf32>
      %c0_69 = arith.constant 0 : index
      %c4_70 = arith.constant 4 : index
      %c0_71 = arith.constant 0 : index
      %c0_72 = arith.constant 0 : index
      %c0_73 = arith.constant 0 : index
      %78 = vector.load %arg5[%c0_69, %c4_70, %c0_71, %c0_72, %c0_73] : memref<1x7x2x8x128xf32, #tpu.memory_space<vmem>>, vector<1x1x2x8x128xf32>
      %79 = vector.shape_cast %78 : vector<1x1x2x8x128xf32> to vector<2x8x128xf32>
      %80 = vector.shape_cast %77 : vector<2x8x128xf32> to vector<1x1x2x8x128xf32>
      tpu.vector_store %arg5[%c0_69, %c4_70, %c0_71, %c0_72, %c0_73], %80 {strides = array<i32>} : memref<1x7x2x8x128xf32, #tpu.memory_space<vmem>>, vector<1x1x2x8x128xf32>,
      %c0_74 = arith.constant 0 : index
      %c5 = arith.constant 5 : index
      %c0_75 = arith.constant 0 : index
      %c0_76 = arith.constant 0 : index
      %c0_77 = arith.constant 0 : index
      %81 = vector.load %arg5[%c0_74, %c5, %c0_75, %c0_76, %c0_77] : memref<1x7x2x8x128xf32, #tpu.memory_space<vmem>>, vector<1x1x2x8x128xf32>
      %82 = vector.shape_cast %81 : vector<1x1x2x8x128xf32> to vector<2x8x128xf32>
      %83 = arith.addf %82, %43 : vector<2x8x128xf32>
      %c0_78 = arith.constant 0 : index
      %c5_79 = arith.constant 5 : index
      %c0_80 = arith.constant 0 : index
      %c0_81 = arith.constant 0 : index
      %c0_82 = arith.constant 0 : index
      %84 = vector.load %arg5[%c0_78, %c5_79, %c0_80, %c0_81, %c0_82] : memref<1x7x2x8x128xf32, #tpu.memory_space<vmem>>, vector<1x1x2x8x128xf32>
      %85 = vector.shape_cast %84 : vector<1x1x2x8x128xf32> to vector<2x8x128xf32>
      %86 = vector.shape_cast %83 : vector<2x8x128xf32> to vector<1x1x2x8x128xf32>
      tpu.vector_store %arg5[%c0_78, %c5_79, %c0_80, %c0_81, %c0_82], %86 {strides = array<i32>} : memref<1x7x2x8x128xf32, #tpu.memory_space<vmem>>, vector<1x1x2x8x128xf32>,
      %c0_83 = arith.constant 0 : index
      %c6 = arith.constant 6 : index
      %c0_84 = arith.constant 0 : index
      %c0_85 = arith.constant 0 : index
      %c0_86 = arith.constant 0 : index
      %87 = vector.load %arg5[%c0_83, %c6, %c0_84, %c0_85, %c0_86] : memref<1x7x2x8x128xf32, #tpu.memory_space<vmem>>, vector<1x1x2x8x128xf32>
      %88 = vector.shape_cast %87 : vector<1x1x2x8x128xf32> to vector<2x8x128xf32>
      %89 = arith.addf %88, %50 : vector<2x8x128xf32>
      %c0_87 = arith.constant 0 : index
      %c6_88 = arith.constant 6 : index
      %c0_89 = arith.constant 0 : index
      %c0_90 = arith.constant 0 : index
      %c0_91 = arith.constant 0 : index
      %90 = vector.load %arg5[%c0_87, %c6_88, %c0_89, %c0_90, %c0_91] : memref<1x7x2x8x128xf32, #tpu.memory_space<vmem>>, vector<1x1x2x8x128xf32>
      %91 = vector.shape_cast %90 : vector<1x1x2x8x128xf32> to vector<2x8x128xf32>
      %92 = vector.shape_cast %89 : vector<2x8x128xf32> to vector<1x1x2x8x128xf32>
      tpu.vector_store %arg5[%c0_87, %c6_88, %c0_89, %c0_90, %c0_91], %92 {strides = array<i32>} : memref<1x7x2x8x128xf32, #tpu.memory_space<vmem>>, vector<1x1x2x8x128xf32>,
    } else {
    }
    return
  }
  func.func @transform_0(%arg0: i32, %arg1: i32) -> (i32, i32, i32, i32) {
    %c1_i32 = arith.constant 1 : i32
    %0 = arith.muli %arg0, %c1_i32 : i32
    %1 = arith.addi %0, %arg1 : i32
    %c0_i32 = arith.constant 0 : i32
    %2 = arith.minsi %1, %c0_i32 : i32
    %c0_i32_0 = arith.constant 0 : i32
    %c0_i32_1 = arith.constant 0 : i32
    %c0_i32_2 = arith.constant 0 : i32
    %c0_i32_3 = arith.constant 0 : i32
    return %c0_i32_0, %2, %c0_i32_1, %c0_i32_2 : i32, i32, i32, i32
  }
  func.func @transform_1(%arg0: i32, %arg1: i32) -> (i32, i32, i32, i32) {
    %c1_i32 = arith.constant 1 : i32
    %0 = arith.muli %arg0, %c1_i32 : i32
    %1 = arith.addi %0, %arg1 : i32
    %c0_i32 = arith.constant 0 : i32
    %2 = arith.minsi %1, %c0_i32 : i32
    %c0_i32_0 = arith.constant 0 : i32
    %c0_i32_1 = arith.constant 0 : i32
    %c0_i32_2 = arith.constant 0 : i32
    %c0_i32_3 = arith.constant 0 : i32
    return %c0_i32_0, %2, %c0_i32_1, %c0_i32_2 : i32, i32, i32, i32
  }
  func.func @transform_2(%arg0: i32, %arg1: i32) -> (i32, i32, i32, i32) {
    %c1_i32 = arith.constant 1 : i32
    %0 = arith.muli %arg0, %c1_i32 : i32
    %1 = arith.addi %0, %arg1 : i32
    %c0_i32 = arith.constant 0 : i32
    %2 = arith.minsi %1, %c0_i32 : i32
    %c0_i32_0 = arith.constant 0 : i32
    %c0_i32_1 = arith.constant 0 : i32
    %c0_i32_2 = arith.constant 0 : i32
    %c0_i32_3 = arith.constant 0 : i32
    return %c0_i32_0, %2, %c0_i32_1, %c0_i32_2 : i32, i32, i32, i32
  }
  func.func @transform_3(%arg0: i32, %arg1: i32) -> (i32, i32, i32, i32, i32) {
    %c0_i32 = arith.constant 0 : i32
    %c0_i32_0 = arith.constant 0 : i32
    %c0_i32_1 = arith.constant 0 : i32
    %c0_i32_2 = arith.constant 0 : i32
    %c0_i32_3 = arith.constant 0 : i32
    return %arg0, %c0_i32, %c0_i32_0, %c0_i32_1, %c0_i32_2 : i32, i32, i32, i32, i32
  }
}

</mosaic_0001>

<llo_original>
// kernel: auf_loss.1
$region0: #{auf_loss.1}
  #allocation0 [shape = 'u32[]', space=smem, size = 0x4, offset = 0x4, fixed_abs, tag = 'smem constant byte address 0x4 - core index']
  #allocation1 [shape = 'u32[144,128]{1,0:T(1,128)}', space=vmem, size = 0x12000, scoped, tag = 'internal scratch']
  %s0 = inlined_call_operand.vmem [shape: f32[2,1,8,128], index: 0, kind: input, shape index: {}]
  %s1 = inlined_call_operand.vmem [shape: f32[2,1,8,128], index: 1, kind: input, shape index: {}]
  %s2 = inlined_call_operand.vmem [shape: f32[2,1,8,128], index: 2, kind: input, shape index: {}]
  %s3 = inlined_call_operand.vmem [shape: f32[1,7,2,8,128], index: 3, kind: output, shape index: {}]
  %s4 = sld [smem:[#allocation0]]
  $region34: #{auf_loss.1} parent=0
    _
  %s6 = ssub.s32 1, %s4
  %s7 = scalar_select 0, %s6, %s4
  // Predicated region
  $region2: #{auf_loss.1} parent=0 // pred_check
    _
  $region3: #{auf_loss.1} parent=0 // pred_check_branch
    %9 = sbr.rel (0) target = $region5
  $region4: #{auf_loss.1} parent=0 // pred_region
    %s10 = sadd.s32 0, 0
    %p11 = scmp.lt.s32.totalorder %s10, 0
    %s12 = scalar_select %p11, %s10, 0
    %p13 = scmp.lt.s32.totalorder %s12, 0
    %s14 = scalar_select %p13, %s12, 0
    %s15 = smul.addr %s14, 8
    %s16 = scalar_lea.vmem %s0, %s15
    %s17 = sadd.s32 0, 0
    %p18 = scmp.lt.s32.totalorder %s17, 0
    %s19 = scalar_select %p18, %s17, 0
  $region5: #{auf_loss.1} parent=0 // pred_fallthru
    _
  // Predicated region
  $region6: #{auf_loss.1} parent=0 // pred_check
    _
  $region7: #{auf_loss.1} parent=0 // pred_check_branch
    %21 = sbr.rel (0) target = $region9
  $region8: #{auf_loss.1} parent=0 // pred_region
    %s22 = sadd.s32 0, 0
    %p23 = scmp.lt.s32.totalorder %s22, 0
    %s24 = scalar_select %p23, %s22, 0
    %p25 = scmp.lt.s32.totalorder %s24, 0
    %s26 = scalar_select %p25, %s24, 0
    %s27 = smul.addr %s26, 8
    %s28 = scalar_lea.vmem %s1, %s27
    %s29 = sadd.s32 0, 0
    %p30 = scmp.lt.s32.totalorder %s29, 0
    %s31 = scalar_select %p30, %s29, 0
  $region9: #{auf_loss.1} parent=0 // pred_fallthru
    _
  // Predicated region
  $region10: #{auf_loss.1} parent=0 // pred_check
    _
  $region11: #{auf_loss.1} parent=0 // pred_check_branch
    %33 = sbr.rel (0) target = $region13
  $region12: #{auf_loss.1} parent=0 // pred_region
    %s34 = sadd.s32 0, 0
    %p35 = scmp.lt.s32.totalorder %s34, 0
    %s36 = scalar_select %p35, %s34, 0
    %p37 = scmp.lt.s32.totalorder %s36, 0
    %s38 = scalar_select %p37, %s36, 0
    %s39 = smul.addr %s38, 8
    %s40 = scalar_lea.vmem %s2, %s39
    %s41 = sadd.s32 0, 0
    %p42 = scmp.lt.s32.totalorder %s41, 0
    %s43 = scalar_select %p42, %s41, 0
  $region13: #{auf_loss.1} parent=0 // pred_fallthru
    _
  %s44 = sadd.s32 0, 0
  %p45 = scmp.lt.s32.totalorder %s44, 0
  %s46 = scalar_select %p45, %s44, 0
  %p47 = scmp.lt.s32.totalorder %s46, 0
  %s48 = scalar_select %p47, %s46, 0
  %s49 = smul.addr %s48, 8
  %s50 = scalar_lea.vmem %s0, %s49
  %s51 = sadd.s32 0, 0
  %p52 = scmp.lt.s32.totalorder %s51, 0
  %s53 = scalar_select %p52, %s51, 0
  %p54 = scmp.lt.s32.totalorder %s53, 0
  %s55 = scalar_select %p54, %s53, 0
  %s56 = smul.addr %s55, 8
  %s57 = scalar_lea.vmem %s1, %s56
  %s58 = sadd.s32 0, 0
  %p59 = scmp.lt.s32.totalorder %s58, 0
  %s60 = scalar_select %p59, %s58, 0
  %p61 = scmp.lt.s32.totalorder %s60, 0
  %s62 = scalar_select %p61, %s60, 0
  %s63 = smul.addr %s62, 8
  %s64 = scalar_lea.vmem %s2, %s63
  %s65 = sadd.s32 0, 0
  %p66 = scmp.lt.s32.totalorder %s65, 0
  %s67 = scalar_select %p66, %s65, 0
  %p68 = scmp.lt.s32.totalorder %s67, 0
  %s69 = scalar_select %p68, %s67, 0
  %s70 = smul.addr %s69, 8
  %s71 = scalar_lea.vmem %s0, %s70
  %s72 = sadd.s32 0, 0
  %p73 = scmp.lt.s32.totalorder %s72, 0
  %s74 = scalar_select %p73, %s72, 0
  %s75 = sadd.s32 0, 0
  %p76 = scmp.lt.s32.totalorder %s75, 0
  %s77 = scalar_select %p76, %s75, 0
  %p78 = scmp.lt.s32.totalorder %s77, 0
  %s79 = scalar_select %p78, %s77, 0
  %s80 = smul.addr %s79, 8
  %s81 = scalar_lea.vmem %s1, %s80
  %s82 = sadd.s32 0, 0
  %p83 = scmp.lt.s32.totalorder %s82, 0
  %s84 = scalar_select %p83, %s82, 0
  %s85 = sadd.s32 0, 0
  %p86 = scmp.lt.s32.totalorder %s85, 0
  %s87 = scalar_select %p86, %s85, 0
  %p88 = scmp.lt.s32.totalorder %s87, 0
  %s89 = scalar_select %p88, %s87, 0
  %s90 = smul.addr %s89, 8
  %s91 = scalar_lea.vmem %s2, %s90
  %s92 = sadd.s32 0, 0
  %p93 = scmp.lt.s32.totalorder %s92, 0
  %s94 = scalar_select %p93, %s92, 0
  %p95 = scmp.eq.s32.totalorder 0, 0
  // Predicated region
  $region14: #{auf_loss.1} parent=0 // pred_check
    %p96 = pneg %p95
  $region15: #{auf_loss.1} parent=0 // pred_check_branch
    %98 = sbr.rel (%p96) target = $region17
  $region16: #{auf_loss.1} parent=0 // pred_region
    %99 = vst [vmem:[%s3] sm:$0xff] 0.0
    %100 = vst [vmem:[%s3 + $0x8] sm:$0xff] 0.0
    %101 = vst [vmem:[%s3 + $0x10] sm:$0xff] 0.0
    %102 = vst [vmem:[%s3 + $0x18] sm:$0xff] 0.0
    %103 = vst [vmem:[%s3 + $0x20] sm:$0xff] 0.0
    %104 = vst [vmem:[%s3 + $0x28] sm:$0xff] 0.0
    %105 = vst [vmem:[%s3 + $0x30] sm:$0xff] 0.0
    %106 = vst [vmem:[%s3 + $0x38] sm:$0xff] 0.0
    %107 = vst [vmem:[%s3 + $0x40] sm:$0xff] 0.0
    %108 = vst [vmem:[%s3 + $0x48] sm:$0xff] 0.0
    %109 = vst [vmem:[%s3 + $0x50] sm:$0xff] 0.0
    %110 = vst [vmem:[%s3 + $0x58] sm:$0xff] 0.0
    %111 = vst [vmem:[%s3 + $0x60] sm:$0xff] 0.0
    %112 = vst [vmem:[%s3 + $0x68] sm:$0xff] 0.0
  $region17: #{auf_loss.1} parent=0 // pred_fallthru
    _
  %s113 = sadd.s32 0, 0
  %s114 = smul.u32 %s113, 1024
  %s115 = sadd.s32 %s114, 1024
  %p116 = scmp.gt.s32.totalorder %s115, 256
  // Predicated region
  $region18: #{auf_loss.1} parent=0 // pred_check
    %p117 = pneg %p116
  $region19: #{auf_loss.1} parent=0 // pred_check_branch
    %119 = sbr.rel (%p117) target = $region21
  $region20: #{auf_loss.1} parent=0 // pred_region
    %v120 = vld [vmem:[%s71] sm:$0xff]
    %v121 = vld [vmem:[%s71 + $0x8] sm:$0xff]
    %v122 = vld [vmem:[%s81] sm:$0xff]
    %v123 = vld [vmem:[%s81 + $0x8] sm:$0xff]
    %v124 = vld [vmem:[%s91] sm:$0xff]
    %v125 = vld [vmem:[%s91 + $0x8] sm:$0xff]
    %v126 = vmul.f32 %v120, %v124
    %v127 = vmul.f32 %v121, %v125
    %v128 = vmax.f32 %v126, 1e-10
    %v129 = vmax.f32 %v127, 1e-10
    %v130 = vmin.f32 %v128, 1.0
    %v131 = vmin.f32 %v129, 1.0
    %v132 = vmul.f32 %v122, %v124
    %v133 = vmul.f32 %v123, %v125
    %v134 = vmax.f32 %v132, 1e-10
    %v135 = vmax.f32 %v133, 1e-10
    %v136 = vmin.f32 %v134, 1.0
    %v137 = vmin.f32 %v135, 1.0
    %v138 = vlaneseq
    %v139 = vshrl.u32 %v138, 7
    %v140 = vlaneseq
    %v141 = vand.u32 %v140, 127
    %v142 = vstv %s114
    %v143 = vmul.u32 %v139, 128
    %v144 = vadd.s32 %v142, %v143
    %v145 = vadd.s32 %v144, %v141
    %vm146 = vcmp.lt.s32.totalorder %v145, 256
    %v147 = vsel %vm146, 1, 0
    %vm148 = vcmp.eq.s32.totalorder %v147, 1
    %v149 = vsel %vm148, %v124, 0.0
    %v150 = vsel %vm148, %v125, 0.0
    %v151 = vsel %vm148, %v136, 0.0
    %v152 = vsel %vm148, %v137, 0.0
    %v153 = vsel %vm148, %v130, 0.0
    %v154 = vsel %vm148, %v131, 0.0
    %v155 = vsel %vm148, %v130, 1.0
    %v156 = vsel %vm148, %v131, 1.0
    %v157 = vlog2.pop %v155
    %v158 = vmul.f32 %v157, 0.6931472
    %v159 = vlog2.pop %v156
    %v160 = vmul.f32 %v159, 0.6931472
    %v161 = vrsqrt.pop %v155
    %v162 = vmul.f32 %v155, %v161
    %vm163 = vcmp.eq.f32.partialorder %v155, inf
    %v164 = vsel %vm163, %v155, %v162
    %vm165 = vcmp.eq.f32.partialorder %v155, 0.0
    %v166 = vand.u32 %v155, 2147483648
    %v167 = vsel %vm165, %v166, %v164
    %v168 = vrsqrt.pop %v156
    %v169 = vmul.f32 %v156, %v168
    %vm170 = vcmp.eq.f32.partialorder %v156, inf
    %v171 = vsel %vm170, %v156, %v169
    %vm172 = vcmp.eq.f32.partialorder %v156, 0.0
    %v173 = vand.u32 %v156, 2147483648
    %v174 = vsel %vm172, %v173, %v171
    %v175 = vadd.f32 %v149, 0.0
    %v176 = vadd.f32 %v150, 0.0
    %v177 = vadd.f32 %v175, 0.0
    %v178 = vadd.f32 %v176, 0.0
    %v179 = vmul.f32 %v151, %v158
    %v180 = vmul.f32 %v152, %v160
    %v181 = vadd.f32 %v179, 0.0
    %v182 = vadd.f32 %v180, 0.0
    %v183 = vadd.f32 %v181, 0.0
    %v184 = vadd.f32 %v182, 0.0
    %v185 = vmul.f32 %v167, %v158
    %v186 = vmul.f32 %v174, %v160
    %v187 = vadd.f32 %v185, 0.0
    %v188 = vadd.f32 %v186, 0.0
    %v189 = vadd.f32 %v187, 0.0
    %v190 = vadd.f32 %v188, 0.0
    %v191 = vadd.f32 %v153, 0.0
    %v192 = vadd.f32 %v154, 0.0
    %v193 = vadd.f32 %v191, 0.0
    %v194 = vadd.f32 %v192, 0.0
    %v195 = vadd.f32 %v151, 0.0
    %v196 = vadd.f32 %v152, 0.0
    %v197 = vadd.f32 %v195, 0.0
    %v198 = vadd.f32 %v196, 0.0
    %v199 = vmul.f32 %v155, %v151
    %v200 = vmul.f32 %v156, %v152
    %v201 = vadd.f32 %v199, 0.0
    %v202 = vadd.f32 %v200, 0.0
    %v203 = vadd.f32 %v201, 0.0
    %v204 = vadd.f32 %v202, 0.0
    %v205 = vsub.f32 1.0, %v155
    %v206 = vsub.f32 1.0, %v156
    %v207 = vsub.f32 1.0, %v151
    %v208 = vsub.f32 1.0, %v152
    %v209 = vmul.f32 %v205, %v207
    %v210 = vmul.f32 %v206, %v208
    %v211 = vadd.f32 %v209, 0.0
    %v212 = vadd.f32 %v210, 0.0
    %v213 = vadd.f32 %v211, 0.0
    %v214 = vadd.f32 %v212, 0.0
    %v215 = vld [vmem:[%s3] sm:$0xff]
    %v216 = vld [vmem:[%s3 + $0x8] sm:$0xff]
    %v217 = vadd.f32 %v215, %v177
    %v218 = vadd.f32 %v216, %v178
    %219 = vst [vmem:[%s3] sm:$0xff] %v217
    %220 = vst [vmem:[%s3 + $0x8] sm:$0xff] %v218
    %s221 = scalar_lea.vmem %s3, 16
    %v222 = vld [vmem:[%s221] sm:$0xff]
    %v223 = vld [vmem:[%s221 + $0x8] sm:$0xff]
    %v224 = vadd.f32 %v222, %v183
    %v225 = vadd.f32 %v223, %v184
    %226 = vst [vmem:[%s221] sm:$0xff] %v224
    %227 = vst [vmem:[%s221 + $0x8] sm:$0xff] %v225
    %s228 = scalar_lea.vmem %s3, 32
    %v229 = vld [vmem:[%s228] sm:$0xff]
    %v230 = vld [vmem:[%s228 + $0x8] sm:$0xff]
    %v231 = vadd.f32 %v229, %v189
    %v232 = vadd.f32 %v230, %v190
    %233 = vst [vmem:[%s228] sm:$0xff] %v231
    %234 = vst [vmem:[%s228 + $0x8] sm:$0xff] %v232
    %s235 = scalar_lea.vmem %s3, 48
    %v236 = vld [vmem:[%s235] sm:$0xff]
    %v237 = vld [vmem:[%s235 + $0x8] sm:$0xff]
    %v238 = vadd.f32 %v236, %v193
    %v239 = vadd.f32 %v237, %v194
    %240 = vst [vmem:[%s235] sm:$0xff] %v238
    %241 = vst [vmem:[%s235 + $0x8] sm:$0xff] %v239
    %s242 = scalar_lea.vmem %s3, 64
    %v243 = vld [vmem:[%s242] sm:$0xff]
    %v244 = vld [vmem:[%s242 + $0x8] sm:$0xff]
    %v245 = vadd.f32 %v243, %v197
    %v246 = vadd.f32 %v244, %v198
    %247 = vst [vmem:[%s242] sm:$0xff] %v245
    %248 = vst [vmem:[%s242 + $0x8] sm:$0xff] %v246
    %s249 = scalar_lea.vmem %s3, 80
    %v250 = vld [vmem:[%s249] sm:$0xff]
    %v251 = vld [vmem:[%s249 + $0x8] sm:$0xff]
    %v252 = vadd.f32 %v250, %v203
    %v253 = vadd.f32 %v251, %v204
    %254 = vst [vmem:[%s249] sm:$0xff] %v252
    %255 = vst [vmem:[%s249 + $0x8] sm:$0xff] %v253
    %s256 = scalar_lea.vmem %s3, 96
    %v257 = vld [vmem:[%s256] sm:$0xff]
    %v258 = vld [vmem:[%s256 + $0x8] sm:$0xff]
    %v259 = vadd.f32 %v257, %v213
    %v260 = vadd.f32 %v258, %v214
    %261 = vst [vmem:[%s256] sm:$0xff] %v259
    %262 = vst [vmem:[%s256 + $0x8] sm:$0xff] %v260
  $region21: #{auf_loss.1} parent=0 // pred_fallthru
    _
  %p263 = scmp.le.s32.totalorder %s115, 256
  // Predicated region
  $region22: #{auf_loss.1} parent=0 // pred_check
    %p264 = pneg %p263
  $region23: #{auf_loss.1} parent=0 // pred_check_branch
    %266 = sbr.rel (%p264) target = $region25
  $region24: #{auf_loss.1} parent=0 // pred_region
    %v267 = vld [vmem:[%s71] sm:$0xff]
    %v268 = vld [vmem:[%s71 + $0x8] sm:$0xff]
    %v269 = vld [vmem:[%s81] sm:$0xff]
    %v270 = vld [vmem:[%s81 + $0x8] sm:$0xff]
    %v271 = vld [vmem:[%s91] sm:$0xff]
    %v272 = vld [vmem:[%s91 + $0x8] sm:$0xff]
    %v273 = vmul.f32 %v267, %v271
    %v274 = vmul.f32 %v268, %v272
    %v275 = vmax.f32 %v273, 1e-10
    %v276 = vmax.f32 %v274, 1e-10
    %v277 = vmin.f32 %v275, 1.0
    %v278 = vmin.f32 %v276, 1.0
    %v279 = vmul.f32 %v269, %v271
    %v280 = vmul.f32 %v270, %v272
    %v281 = vmax.f32 %v279, 1e-10
    %v282 = vmax.f32 %v280, 1e-10
    %v283 = vmin.f32 %v281, 1.0
    %v284 = vmin.f32 %v282, 1.0
    %v285 = vlog2.pop %v277
    %v286 = vmul.f32 %v285, 0.6931472
    %v287 = vlog2.pop %v278
    %v288 = vmul.f32 %v287, 0.6931472
    %v289 = vrsqrt.pop %v277
    %v290 = vmul.f32 %v277, %v289
    %vm291 = vcmp.eq.f32.partialorder %v277, inf
    %v292 = vsel %vm291, %v277, %v290
    %vm293 = vcmp.eq.f32.partialorder %v277, 0.0
    %v294 = vand.u32 %v277, 2147483648
    %v295 = vsel %vm293, %v294, %v292
    %v296 = vrsqrt.pop %v278
    %v297 = vmul.f32 %v278, %v296
    %vm298 = vcmp.eq.f32.partialorder %v278, inf
    %v299 = vsel %vm298, %v278, %v297
    %vm300 = vcmp.eq.f32.partialorder %v278, 0.0
    %v301 = vand.u32 %v278, 2147483648
    %v302 = vsel %vm300, %v301, %v299
    %v303 = vadd.f32 %v271, 0.0
    %v304 = vadd.f32 %v272, 0.0
    %v305 = vadd.f32 %v303, 0.0
    %v306 = vadd.f32 %v304, 0.0
    %v307 = vmul.f32 %v283, %v286
    %v308 = vmul.f32 %v284, %v288
    %v309 = vadd.f32 %v307, 0.0
    %v310 = vadd.f32 %v308, 0.0
    %v311 = vadd.f32 %v309, 0.0
    %v312 = vadd.f32 %v310, 0.0
    %v313 = vmul.f32 %v295, %v286
    %v314 = vmul.f32 %v302, %v288
    %v315 = vadd.f32 %v313, 0.0
    %v316 = vadd.f32 %v314, 0.0
    %v317 = vadd.f32 %v315, 0.0
    %v318 = vadd.f32 %v316, 0.0
    %v319 = vadd.f32 %v277, 0.0
    %v320 = vadd.f32 %v278, 0.0
    %v321 = vadd.f32 %v319, 0.0
    %v322 = vadd.f32 %v320, 0.0
    %v323 = vadd.f32 %v283, 0.0
    %v324 = vadd.f32 %v284, 0.0
    %v325 = vadd.f32 %v323, 0.0
    %v326 = vadd.f32 %v324, 0.0
    %v327 = vmul.f32 %v277, %v283
    %v328 = vmul.f32 %v278, %v284
    %v329 = vadd.f32 %v327, 0.0
    %v330 = vadd.f32 %v328, 0.0
    %v331 = vadd.f32 %v329, 0.0
    %v332 = vadd.f32 %v330, 0.0
    %v333 = vsub.f32 1.0, %v277
    %v334 = vsub.f32 1.0, %v278
    %v335 = vsub.f32 1.0, %v283
    %v336 = vsub.f32 1.0, %v284
    %v337 = vmul.f32 %v333, %v335
    %v338 = vmul.f32 %v334, %v336
    %v339 = vadd.f32 %v337, 0.0
    %v340 = vadd.f32 %v338, 0.0
    %v341 = vadd.f32 %v339, 0.0
    %v342 = vadd.f32 %v340, 0.0
    %v343 = vld [vmem:[%s3] sm:$0xff]
    %v344 = vld [vmem:[%s3 + $0x8] sm:$0xff]
    %v345 = vadd.f32 %v343, %v305
    %v346 = vadd.f32 %v344, %v306
    %347 = vst [vmem:[%s3] sm:$0xff] %v345
    %348 = vst [vmem:[%s3 + $0x8] sm:$0xff] %v346
    %s349 = scalar_lea.vmem %s3, 16
    %v350 = vld [vmem:[%s349] sm:$0xff]
    %v351 = vld [vmem:[%s349 + $0x8] sm:$0xff]
    %v352 = vadd.f32 %v350, %v311
    %v353 = vadd.f32 %v351, %v312
    %354 = vst [vmem:[%s349] sm:$0xff] %v352
    %355 = vst [vmem:[%s349 + $0x8] sm:$0xff] %v353
    %s356 = scalar_lea.vmem %s3, 32
    %v357 = vld [vmem:[%s356] sm:$0xff]
    %v358 = vld [vmem:[%s356 + $0x8] sm:$0xff]
    %v359 = vadd.f32 %v357, %v317
    %v360 = vadd.f32 %v358, %v318
    %361 = vst [vmem:[%s356] sm:$0xff] %v359
    %362 = vst [vmem:[%s356 + $0x8] sm:$0xff] %v360
    %s363 = scalar_lea.vmem %s3, 48
    %v364 = vld [vmem:[%s363] sm:$0xff]
    %v365 = vld [vmem:[%s363 + $0x8] sm:$0xff]
    %v366 = vadd.f32 %v364, %v321
    %v367 = vadd.f32 %v365, %v322
    %368 = vst [vmem:[%s363] sm:$0xff] %v366
    %369 = vst [vmem:[%s363 + $0x8] sm:$0xff] %v367
    %s370 = scalar_lea.vmem %s3, 64
    %v371 = vld [vmem:[%s370] sm:$0xff]
    %v372 = vld [vmem:[%s370 + $0x8] sm:$0xff]
    %v373 = vadd.f32 %v371, %v325
    %v374 = vadd.f32 %v372, %v326
    %375 = vst [vmem:[%s370] sm:$0xff] %v373
    %376 = vst [vmem:[%s370 + $0x8] sm:$0xff] %v374
    %s377 = scalar_lea.vmem %s3, 80
    %v378 = vld [vmem:[%s377] sm:$0xff]
    %v379 = vld [vmem:[%s377 + $0x8] sm:$0xff]
    %v380 = vadd.f32 %v378, %v331
    %v381 = vadd.f32 %v379, %v332
    %382 = vst [vmem:[%s377] sm:$0xff] %v380
    %383 = vst [vmem:[%s377 + $0x8] sm:$0xff] %v381
    %s384 = scalar_lea.vmem %s3, 96
    %v385 = vld [vmem:[%s384] sm:$0xff]
    %v386 = vld [vmem:[%s384 + $0x8] sm:$0xff]
    %v387 = vadd.f32 %v385, %v341
    %v388 = vadd.f32 %v386, %v342
    %389 = vst [vmem:[%s384] sm:$0xff] %v387
    %390 = vst [vmem:[%s384 + $0x8] sm:$0xff] %v388
  $region25: #{auf_loss.1} parent=0 // pred_fallthru
    _
  // Predicated region
  $region26: #{auf_loss.1} parent=0 // pred_check
    _
  $region27: #{auf_loss.1} parent=0 // pred_check_branch
    %392 = sbr.rel (0) target = $region29
  $region28: #{auf_loss.1} parent=0 // pred_region
    _
  $region29: #{auf_loss.1} parent=0 // pred_fallthru
    _
  // Predicated region
  $region30: #{auf_loss.1} parent=0 // pred_check
    _
  $region31: #{auf_loss.1} parent=0 // pred_check_branch
    %394 = sbr.rel (0) target = $region33
  $region32: #{auf_loss.1} parent=0 // pred_region
    _
  $region33: #{auf_loss.1} parent=0 // pred_fallthru
    _

</llo_original>
